<compile_context>
chip_gen: v5e
topology: v5e:2x2
jax: 0.10.0
libtpu: 0.0.40
codegen_flags: <defaults>
</compile_context>

<pallas_src>
import functools
import math

import jax
import jax.numpy as jnp
from jax import lax
from jax.experimental import pallas as pl
from jax.experimental.pallas import tpu as pltpu


def _stne_kernel(mem_init_ref, x_ref, out_ref, mem_sc, *, t_chunk):
    """One (row_block, t_chunk) tile: integrate-and-fire over t_chunk steps."""
    tc = pl.program_id(1)

    # (Re)initialize the membrane from the provided random state at the start
    # of each row-block's time sweep; afterwards it is carried in VMEM scratch.
    @pl.when(tc == 0)
    def _():
        mem_sc[...] = mem_init_ref[...]

    def step(t, mem):
        mem = mem + x_ref[t]                       # integrate
        spike = jnp.where(mem > 1.0, 1.0, 0.0)     # threshold (== mem-1 > 0)
        out_ref[t] = spike
        return mem - spike                         # soft reset

    mem_sc[...] = lax.fori_loop(0, t_chunk, step, mem_sc[...], unroll=True)


def _largest_divisor_leq(n, cap):
    for d in range(min(n, cap), 0, -1):
        if n % d == 0:
            return d
    return 1


def atk_poisson_forward(x, mem_init):
    """x: (T, ...) float32, mem_init: same shape as x[0] (uniform [0,1) noise)."""
    T = x.shape[0]
    feat_shape = x.shape[1:]
    n = math.prod(feat_shape)

    lane = 128
    rows = pl.cdiv(n, lane)
    pad_elems = rows * lane - n

    x_flat = x.reshape(T, n).astype(jnp.float32)      # free view
    m_flat = mem_init.reshape(n).astype(jnp.float32)
    if pad_elems:
        # Only when n % 128 != 0 (demo shapes are lane-aligned -> no copy).
        x_flat = jnp.pad(x_flat, ((0, 0), (0, pad_elems)))
        m_flat = jnp.pad(m_flat, (0, pad_elems))
    x3 = x_flat.reshape(T, rows, lane)
    m2 = m_flat.reshape(rows, lane)

    # Fold up to 8 timesteps into each kernel invocation (must divide T so the
    # trailing "arbitrary" grid axis is exact).
    t_chunk = _largest_divisor_leq(T, 8)
    n_tc = T // t_chunk

    # Row-block size: multiple of 8, sized so one x block is ~<= 2 MiB.
    max_block_rows = max(8, (((2 << 20) // (t_chunk * lane * 4)) // 8) * 8)
    if rows <= max_block_rows:
        block_rows = rows              # full extent is always a legal block dim
    else:
        block_rows = max_block_rows
    n_rb = pl.cdiv(rows, block_rows)

    kernel = functools.partial(_stne_kernel, t_chunk=t_chunk)

    out3 = pl.pallas_call(
        kernel,
        out_shape=jax.ShapeDtypeStruct((T, rows, lane), jnp.float32),
        grid_spec=pltpu.PrefetchScalarGridSpec(
            num_scalar_prefetch=0,
            grid=(n_rb, n_tc),
            in_specs=[
                # Initial membrane for this row block (resident across tc).
                pl.BlockSpec((block_rows, lane), lambda i, tc: (i, 0)),
                # x tile: t_chunk timesteps of this row block.
                pl.BlockSpec((t_chunk, block_rows, lane), lambda i, tc: (tc, i, 0)),
            ],
            out_specs=pl.BlockSpec((t_chunk, block_rows, lane), lambda i, tc: (tc, i, 0)),
            scratch_shapes=[pltpu.VMEM((block_rows, lane), jnp.float32)],
        ),
        compiler_params=pltpu.CompilerParams(
            # Row blocks are independent (megacore-parallel on v7x); the time
            # chunk axis carries the membrane and must stay sequential.
            dimension_semantics=("parallel", "arbitrary"),
        ),
    )(m2, x3)

    out = out3.reshape(T, rows * lane)
    if pad_elems:
        out = out[:, :n]
    return out.reshape((T,) + feat_shape)


def _reference(x, mem_init):
    """Pure-JAX reference of STNE.forward for verification."""
    def step(mem, xt):
        mem = mem + xt
        spike = (mem - 1.0 > 0.0).astype(jnp.float32)
        mem = mem - spike
        return mem, spike

    _, spikes = lax.scan(step, mem_init, x)
    return spikes


# TODO(synk): STNE.backward defines a surrogate gradient; only the forward pass
# is implemented here.

if __name__ == "__main__":
    key = jax.random.PRNGKey(0)
    k_x, k_m = jax.random.split(key)

    T, B, C, H, W = 8, 2, 4, 16, 16
    x = jax.random.uniform(k_x, (T, B, C, H, W), dtype=jnp.float32)
    # torch.rand_like(x[0]) -> uniform [0, 1) initial membrane, made explicit
    # so the kernel is deterministic and checkable against the reference.
    mem_init = jax.random.uniform(k_m, (B, C, H, W), dtype=jnp.float32)

    out = jax.block_until_ready(atk_poisson_forward(x, mem_init))
    ref = jax.block_until_ready(_reference(x, mem_init))

    assert out.shape == x.shape, (out.shape, x.shape)
    assert out.dtype == jnp.float32
    assert jnp.array_equal(out, ref), "mismatch vs reference"

    print("KERNEL_OK")
</pallas_src>

<mosaic_0001>
module attributes {stable_mosaic.version = 11 : i64} {
  func.func @_stne_kernel(%arg0: i32, %arg1: i32, %arg2: memref<16x128xf32, #tpu.memory_space<vmem>>, %arg3: memref<8x16x128xf32, #tpu.memory_space<vmem>>, %arg4: memref<8x16x128xf32, #tpu.memory_space<vmem>>, %arg5: memref<16x128xf32, #tpu.memory_space<vmem>>) attributes {dimension_semantics = [#tpu.dimension_semantics<parallel>, #tpu.dimension_semantics<arbitrary>], iteration_bounds = array<i64: 1, 1>, scalar_prefetch = 0 : i64, scratch_operands = 1 : i64, tpu.core_type = #tpu.core_type<tc>, window_params = [{transform_indices = @transform_0, window_bounds = array<i64: 16, 128>}, {transform_indices = @transform_1, window_bounds = array<i64: 8, 16, 128>}, {transform_indices = @transform_2, window_bounds = array<i64: 8, 16, 128>}]} {
    %c0_i32 = arith.constant 0 : i32
    %0 = arith.cmpi eq, %arg1, %c0_i32 : i32
    %1 = arith.extui %0 : i1 to i32
    %c0_i32_0 = arith.constant 0 : i32
    %2 = arith.cmpi ne, %1, %c0_i32_0 : i32
    scf.if %2 {
      %c0_60 = arith.constant 0 : index
      %c0_61 = arith.constant 0 : index
      %117 = vector.load %arg2[%c0_60, %c0_61] : memref<16x128xf32, #tpu.memory_space<vmem>>, vector<16x128xf32>
      %c0_62 = arith.constant 0 : index
      %c0_63 = arith.constant 0 : index
      %118 = vector.load %arg5[%c0_62, %c0_63] : memref<16x128xf32, #tpu.memory_space<vmem>>, vector<16x128xf32>
      tpu.vector_store %arg5[%c0_62, %c0_63], %117 {strides = array<i32>} : memref<16x128xf32, #tpu.memory_space<vmem>>, vector<16x128xf32>,
    } else {
    }
    %c0 = arith.constant 0 : index
    %c0_1 = arith.constant 0 : index
    %3 = vector.load %arg5[%c0, %c0_1] : memref<16x128xf32, #tpu.memory_space<vmem>>, vector<16x128xf32>
    %c0_i32_2 = arith.constant 0 : i32
    %4 = arith.index_cast %c0_i32_2 : i32 to index
    %c0_3 = arith.constant 0 : index
    %c0_4 = arith.constant 0 : index
    %5 = vector.load %arg3[%4, %c0_3, %c0_4] : memref<8x16x128xf32, #tpu.memory_space<vmem>>, vector<1x16x128xf32>
    %6 = vector.shape_cast %5 : vector<1x16x128xf32> to vector<16x128xf32>
    %7 = arith.addf %3, %6 : vector<16x128xf32>
    %cst = arith.constant 1.000000e+00 : f32
    %8 = vector.broadcast %cst : f32 to vector<16x128xf32>
    %9 = arith.cmpf ogt, %7, %8 : vector<16x128xf32>
    %cst_5 = arith.constant 1.000000e+00 : f32
    %cst_6 = arith.constant 0.000000e+00 : f32
    %10 = vector.broadcast %cst_5 : f32 to vector<16x128xf32>
    %11 = vector.broadcast %cst_6 : f32 to vector<16x128xf32>
    %12 = arith.select %9, %10, %11 : vector<16x128xi1>, vector<16x128xf32>
    %13 = arith.index_cast %c0_i32_2 : i32 to index
    %c0_7 = arith.constant 0 : index
    %c0_8 = arith.constant 0 : index
    %14 = vector.load %arg4[%13, %c0_7, %c0_8] : memref<8x16x128xf32, #tpu.memory_space<vmem>>, vector<1x16x128xf32>
    %15 = vector.shape_cast %14 : vector<1x16x128xf32> to vector<16x128xf32>
    %16 = vector.shape_cast %12 : vector<16x128xf32> to vector<1x16x128xf32>
    tpu.vector_store %arg4[%13, %c0_7, %c0_8], %16 {strides = array<i32>} : memref<8x16x128xf32, #tpu.memory_space<vmem>>, vector<1x16x128xf32>,
    %17 = arith.subf %7, %12 : vector<16x128xf32>
    %c1_i32 = arith.constant 1 : i32
    %18 = arith.index_cast %c1_i32 : i32 to index
    %c0_9 = arith.constant 0 : index
    %c0_10 = arith.constant 0 : index
    %19 = vector.load %arg3[%18, %c0_9, %c0_10] : memref<8x16x128xf32, #tpu.memory_space<vmem>>, vector<1x16x128xf32>
    %20 = vector.shape_cast %19 : vector<1x16x128xf32> to vector<16x128xf32>
    %21 = arith.addf %17, %20 : vector<16x128xf32>
    %cst_11 = arith.constant 1.000000e+00 : f32
    %22 = vector.broadcast %cst_11 : f32 to vector<16x128xf32>
    %23 = arith.cmpf ogt, %21, %22 : vector<16x128xf32>
    %cst_12 = arith.constant 1.000000e+00 : f32
    %cst_13 = arith.constant 0.000000e+00 : f32
    %24 = vector.broadcast %cst_12 : f32 to vector<16x128xf32>
    %25 = vector.broadcast %cst_13 : f32 to vector<16x128xf32>
    %26 = arith.select %23, %24, %25 : vector<16x128xi1>, vector<16x128xf32>
    %27 = arith.index_cast %c1_i32 : i32 to index
    %c0_14 = arith.constant 0 : index
    %c0_15 = arith.constant 0 : index
    %28 = vector.load %arg4[%27, %c0_14, %c0_15] : memref<8x16x128xf32, #tpu.memory_space<vmem>>, vector<1x16x128xf32>
    %29 = vector.shape_cast %28 : vector<1x16x128xf32> to vector<16x128xf32>
    %30 = vector.shape_cast %26 : vector<16x128xf32> to vector<1x16x128xf32>
    tpu.vector_store %arg4[%27, %c0_14, %c0_15], %30 {strides = array<i32>} : memref<8x16x128xf32, #tpu.memory_space<vmem>>, vector<1x16x128xf32>,
    %31 = arith.subf %21, %26 : vector<16x128xf32>
    %c2_i32 = arith.constant 2 : i32
    %32 = arith.index_cast %c2_i32 : i32 to index
    %c0_16 = arith.constant 0 : index
    %c0_17 = arith.constant 0 : index
    %33 = vector.load %arg3[%32, %c0_16, %c0_17] : memref<8x16x128xf32, #tpu.memory_space<vmem>>, vector<1x16x128xf32>
    %34 = vector.shape_cast %33 : vector<1x16x128xf32> to vector<16x128xf32>
    %35 = arith.addf %31, %34 : vector<16x128xf32>
    %cst_18 = arith.constant 1.000000e+00 : f32
    %36 = vector.broadcast %cst_18 : f32 to vector<16x128xf32>
    %37 = arith.cmpf ogt, %35, %36 : vector<16x128xf32>
    %cst_19 = arith.constant 1.000000e+00 : f32
    %cst_20 = arith.constant 0.000000e+00 : f32
    %38 = vector.broadcast %cst_19 : f32 to vector<16x128xf32>
    %39 = vector.broadcast %cst_20 : f32 to vector<16x128xf32>
    %40 = arith.select %37, %38, %39 : vector<16x128xi1>, vector<16x128xf32>
    %41 = arith.index_cast %c2_i32 : i32 to index
    %c0_21 = arith.constant 0 : index
    %c0_22 = arith.constant 0 : index
    %42 = vector.load %arg4[%41, %c0_21, %c0_22] : memref<8x16x128xf32, #tpu.memory_space<vmem>>, vector<1x16x128xf32>
    %43 = vector.shape_cast %42 : vector<1x16x128xf32> to vector<16x128xf32>
    %44 = vector.shape_cast %40 : vector<16x128xf32> to vector<1x16x128xf32>
    tpu.vector_store %arg4[%41, %c0_21, %c0_22], %44 {strides = array<i32>} : memref<8x16x128xf32, #tpu.memory_space<vmem>>, vector<1x16x128xf32>,
    %45 = arith.subf %35, %40 : vector<16x128xf32>
    %c3_i32 = arith.constant 3 : i32
    %46 = arith.index_cast %c3_i32 : i32 to index
    %c0_23 = arith.constant 0 : index
    %c0_24 = arith.constant 0 : index
    %47 = vector.load %arg3[%46, %c0_23, %c0_24] : memref<8x16x128xf32, #tpu.memory_space<vmem>>, vector<1x16x128xf32>
    %48 = vector.shape_cast %47 : vector<1x16x128xf32> to vector<16x128xf32>
    %49 = arith.addf %45, %48 : vector<16x128xf32>
    %cst_25 = arith.constant 1.000000e+00 : f32
    %50 = vector.broadcast %cst_25 : f32 to vector<16x128xf32>
    %51 = arith.cmpf ogt, %49, %50 : vector<16x128xf32>
    %cst_26 = arith.constant 1.000000e+00 : f32
    %cst_27 = arith.constant 0.000000e+00 : f32
    %52 = vector.broadcast %cst_26 : f32 to vector<16x128xf32>
    %53 = vector.broadcast %cst_27 : f32 to vector<16x128xf32>
    %54 = arith.select %51, %52, %53 : vector<16x128xi1>, vector<16x128xf32>
    %55 = arith.index_cast %c3_i32 : i32 to index
    %c0_28 = arith.constant 0 : index
    %c0_29 = arith.constant 0 : index
    %56 = vector.load %arg4[%55, %c0_28, %c0_29] : memref<8x16x128xf32, #tpu.memory_space<vmem>>, vector<1x16x128xf32>
    %57 = vector.shape_cast %56 : vector<1x16x128xf32> to vector<16x128xf32>
    %58 = vector.shape_cast %54 : vector<16x128xf32> to vector<1x16x128xf32>
    tpu.vector_store %arg4[%55, %c0_28, %c0_29], %58 {strides = array<i32>} : memref<8x16x128xf32, #tpu.memory_space<vmem>>, vector<1x16x128xf32>,
    %59 = arith.subf %49, %54 : vector<16x128xf32>
    %c4_i32 = arith.constant 4 : i32
    %60 = arith.index_cast %c4_i32 : i32 to index
    %c0_30 = arith.constant 0 : index
    %c0_31 = arith.constant 0 : index
    %61 = vector.load %arg3[%60, %c0_30, %c0_31] : memref<8x16x128xf32, #tpu.memory_space<vmem>>, vector<1x16x128xf32>
    %62 = vector.shape_cast %61 : vector<1x16x128xf32> to vector<16x128xf32>
    %63 = arith.addf %59, %62 : vector<16x128xf32>
    %cst_32 = arith.constant 1.000000e+00 : f32
    %64 = vector.broadcast %cst_32 : f32 to vector<16x128xf32>
    %65 = arith.cmpf ogt, %63, %64 : vector<16x128xf32>
    %cst_33 = arith.constant 1.000000e+00 : f32
    %cst_34 = arith.constant 0.000000e+00 : f32
    %66 = vector.broadcast %cst_33 : f32 to vector<16x128xf32>
    %67 = vector.broadcast %cst_34 : f32 to vector<16x128xf32>
    %68 = arith.select %65, %66, %67 : vector<16x128xi1>, vector<16x128xf32>
    %69 = arith.index_cast %c4_i32 : i32 to index
    %c0_35 = arith.constant 0 : index
    %c0_36 = arith.constant 0 : index
    %70 = vector.load %arg4[%69, %c0_35, %c0_36] : memref<8x16x128xf32, #tpu.memory_space<vmem>>, vector<1x16x128xf32>
    %71 = vector.shape_cast %70 : vector<1x16x128xf32> to vector<16x128xf32>
    %72 = vector.shape_cast %68 : vector<16x128xf32> to vector<1x16x128xf32>
    tpu.vector_store %arg4[%69, %c0_35, %c0_36], %72 {strides = array<i32>} : memref<8x16x128xf32, #tpu.memory_space<vmem>>, vector<1x16x128xf32>,
    %73 = arith.subf %63, %68 : vector<16x128xf32>
    %c5_i32 = arith.constant 5 : i32
    %74 = arith.index_cast %c5_i32 : i32 to index
    %c0_37 = arith.constant 0 : index
    %c0_38 = arith.constant 0 : index
    %75 = vector.load %arg3[%74, %c0_37, %c0_38] : memref<8x16x128xf32, #tpu.memory_space<vmem>>, vector<1x16x128xf32>
    %76 = vector.shape_cast %75 : vector<1x16x128xf32> to vector<16x128xf32>
    %77 = arith.addf %73, %76 : vector<16x128xf32>
    %cst_39 = arith.constant 1.000000e+00 : f32
    %78 = vector.broadcast %cst_39 : f32 to vector<16x128xf32>
    %79 = arith.cmpf ogt, %77, %78 : vector<16x128xf32>
    %cst_40 = arith.constant 1.000000e+00 : f32
    %cst_41 = arith.constant 0.000000e+00 : f32
    %80 = vector.broadcast %cst_40 : f32 to vector<16x128xf32>
    %81 = vector.broadcast %cst_41 : f32 to vector<16x128xf32>
    %82 = arith.select %79, %80, %81 : vector<16x128xi1>, vector<16x128xf32>
    %83 = arith.index_cast %c5_i32 : i32 to index
    %c0_42 = arith.constant 0 : index
    %c0_43 = arith.constant 0 : index
    %84 = vector.load %arg4[%83, %c0_42, %c0_43] : memref<8x16x128xf32, #tpu.memory_space<vmem>>, vector<1x16x128xf32>
    %85 = vector.shape_cast %84 : vector<1x16x128xf32> to vector<16x128xf32>
    %86 = vector.shape_cast %82 : vector<16x128xf32> to vector<1x16x128xf32>
    tpu.vector_store %arg4[%83, %c0_42, %c0_43], %86 {strides = array<i32>} : memref<8x16x128xf32, #tpu.memory_space<vmem>>, vector<1x16x128xf32>,
    %87 = arith.subf %77, %82 : vector<16x128xf32>
    %c6_i32 = arith.constant 6 : i32
    %88 = arith.index_cast %c6_i32 : i32 to index
    %c0_44 = arith.constant 0 : index
    %c0_45 = arith.constant 0 : index
    %89 = vector.load %arg3[%88, %c0_44, %c0_45] : memref<8x16x128xf32, #tpu.memory_space<vmem>>, vector<1x16x128xf32>
    %90 = vector.shape_cast %89 : vector<1x16x128xf32> to vector<16x128xf32>
    %91 = arith.addf %87, %90 : vector<16x128xf32>
    %cst_46 = arith.constant 1.000000e+00 : f32
    %92 = vector.broadcast %cst_46 : f32 to vector<16x128xf32>
    %93 = arith.cmpf ogt, %91, %92 : vector<16x128xf32>
    %cst_47 = arith.constant 1.000000e+00 : f32
    %cst_48 = arith.constant 0.000000e+00 : f32
    %94 = vector.broadcast %cst_47 : f32 to vector<16x128xf32>
    %95 = vector.broadcast %cst_48 : f32 to vector<16x128xf32>
    %96 = arith.select %93, %94, %95 : vector<16x128xi1>, vector<16x128xf32>
    %97 = arith.index_cast %c6_i32 : i32 to index
    %c0_49 = arith.constant 0 : index
    %c0_50 = arith.constant 0 : index
    %98 = vector.load %arg4[%97, %c0_49, %c0_50] : memref<8x16x128xf32, #tpu.memory_space<vmem>>, vector<1x16x128xf32>
    %99 = vector.shape_cast %98 : vector<1x16x128xf32> to vector<16x128xf32>
    %100 = vector.shape_cast %96 : vector<16x128xf32> to vector<1x16x128xf32>
    tpu.vector_store %arg4[%97, %c0_49, %c0_50], %100 {strides = array<i32>} : memref<8x16x128xf32, #tpu.memory_space<vmem>>, vector<1x16x128xf32>,
    %101 = arith.subf %91, %96 : vector<16x128xf32>
    %c7_i32 = arith.constant 7 : i32
    %102 = arith.index_cast %c7_i32 : i32 to index
    %c0_51 = arith.constant 0 : index
    %c0_52 = arith.constant 0 : index
    %103 = vector.load %arg3[%102, %c0_51, %c0_52] : memref<8x16x128xf32, #tpu.memory_space<vmem>>, vector<1x16x128xf32>
    %104 = vector.shape_cast %103 : vector<1x16x128xf32> to vector<16x128xf32>
    %105 = arith.addf %101, %104 : vector<16x128xf32>
    %cst_53 = arith.constant 1.000000e+00 : f32
    %106 = vector.broadcast %cst_53 : f32 to vector<16x128xf32>
    %107 = arith.cmpf ogt, %105, %106 : vector<16x128xf32>
    %cst_54 = arith.constant 1.000000e+00 : f32
    %cst_55 = arith.constant 0.000000e+00 : f32
    %108 = vector.broadcast %cst_54 : f32 to vector<16x128xf32>
    %109 = vector.broadcast %cst_55 : f32 to vector<16x128xf32>
    %110 = arith.select %107, %108, %109 : vector<16x128xi1>, vector<16x128xf32>
    %111 = arith.index_cast %c7_i32 : i32 to index
    %c0_56 = arith.constant 0 : index
    %c0_57 = arith.constant 0 : index
    %112 = vector.load %arg4[%111, %c0_56, %c0_57] : memref<8x16x128xf32, #tpu.memory_space<vmem>>, vector<1x16x128xf32>
    %113 = vector.shape_cast %112 : vector<1x16x128xf32> to vector<16x128xf32>
    %114 = vector.shape_cast %110 : vector<16x128xf32> to vector<1x16x128xf32>
    tpu.vector_store %arg4[%111, %c0_56, %c0_57], %114 {strides = array<i32>} : memref<8x16x128xf32, #tpu.memory_space<vmem>>, vector<1x16x128xf32>,
    %115 = arith.subf %105, %110 : vector<16x128xf32>
    %c8_i32 = arith.constant 8 : i32
    %c0_58 = arith.constant 0 : index
    %c0_59 = arith.constant 0 : index
    %116 = vector.load %arg5[%c0_58, %c0_59] : memref<16x128xf32, #tpu.memory_space<vmem>>, vector<16x128xf32>
    tpu.vector_store %arg5[%c0_58, %c0_59], %115 {strides = array<i32>} : memref<16x128xf32, #tpu.memory_space<vmem>>, vector<16x128xf32>,
    return
  }
  func.func @transform_0(%arg0: i32, %arg1: i32) -> (i32, i32) {
    %c0_i32 = arith.constant 0 : i32
    %c0_i32_0 = arith.constant 0 : i32
    return %arg0, %c0_i32 : i32, i32
  }
  func.func @transform_1(%arg0: i32, %arg1: i32) -> (i32, i32, i32) {
    %c0_i32 = arith.constant 0 : i32
    %c0_i32_0 = arith.constant 0 : i32
    return %arg1, %arg0, %c0_i32 : i32, i32, i32
  }
  func.func @transform_2(%arg0: i32, %arg1: i32) -> (i32, i32, i32) {
    %c0_i32 = arith.constant 0 : i32
    %c0_i32_0 = arith.constant 0 : i32
    return %arg1, %arg0, %c0_i32 : i32, i32, i32
  }
}

</mosaic_0001>

<llo_original>
// kernel: tpu_custom_call.1
$region0: #{tpu_custom_call.1}
  #allocation0 [shape = 'u32[]', space=smem, size = 0x4, offset = 0x4, fixed_abs, tag = 'smem constant byte address 0x4 - core index']
  #allocation1 [shape = 'u32[72,128]{1,0:T(1,128)}', space=vmem, size = 0x9000, scoped, tag = 'internal scratch']
  #allocation2 [shape = 'f32[16,128]{1,0:T(8,128)}', space=vmem, size = 0x2000, scoped, tag = 'scratch operand']
  %s0 = inlined_call_operand.hbm [shape: f32[16,128], index: 0, kind: input, shape index: {}]
  %s1 = inlined_call_operand.hbm [shape: f32[8,16,128], index: 1, kind: input, shape index: {}]
  %s2 = inlined_call_operand.hbm [shape: f32[8,16,128], index: 2, kind: output, shape index: {}]
  %s3 = sld [smem:[#allocation0]]
  $region30: #{tpu_custom_call.1} parent=0
    _
  %s5 = ssub.s32 1, %s3
  %s6 = scalar_select 0, %s5, %s3
  $region1: #{tpu_custom_call.1} parent=0
    #allocation3 [shape = 'u8[8192]{0}', space=vmem, size = 0x2000, scoped, tag = 'input window, operand 0, single buffered']
    #allocation4 [shape = 's32[1]{0}', space=sflag, size = 0x4, scoped, tag = 'scoped memory for tpu_custom_call.1']
    #allocation5 [shape = 's32[1]{0}', space=sflag, size = 0x4, scoped, tag = 'scoped memory for tpu_custom_call.1']
    #allocation6 [shape = 'u8[65536]{0}', space=vmem, size = 0x10000, scoped, tag = 'input window, operand 1, single buffered']
    #allocation7 [shape = 's32[1]{0}', space=sflag, size = 0x4, scoped, tag = 'scoped memory for tpu_custom_call.1']
    #allocation8 [shape = 'u8[65536]{0}', space=vmem, size = 0x10000, scoped, tag = 'output window, operand 0, single buffered']
    %7 = vsyncpa [#allocation4], 0
    %8 = vsyncpa [#allocation7], 0
    %9 = vsyncpa [#allocation5], 0
    // Predicated region
    $region2: #{tpu_custom_call.1} parent=1 // pred_check
      _
    $region3: #{tpu_custom_call.1} parent=1 // pred_check_branch
      %11 = sbr.rel (0) target = $region5
    $region4: #{tpu_custom_call.1} parent=1 // pred_region
      %13 = vsyncadd [#allocation4], 0
      %s14 = sshll.u32 %s0, 4
      %s15 = int_to_ptr.hbm [resolvable:$true] %s14
      %s16 = sshll.u32 [#allocation3], 4
      %s17 = int_to_ptr.vmem [resolvable:$true] %s16
      %22 = dma.hbm_to_vmem [thread:$0]  %s15, 256, %s17, [#allocation4], 128, 128, 8
    $region5: #{tpu_custom_call.1} parent=1 // pred_fallthru
      _
    // Predicated region
    $region6: #{tpu_custom_call.1} parent=1 // pred_check
      _
    $region7: #{tpu_custom_call.1} parent=1 // pred_check_branch
      %24 = sbr.rel (0) target = $region9
    $region8: #{tpu_custom_call.1} parent=1 // pred_region
      %26 = vsyncadd [#allocation7], 0
      %s27 = sshll.u32 %s1, 4
      %s28 = int_to_ptr.hbm [resolvable:$true] %s27
      %s29 = sshll.u32 [#allocation6], 4
      %s30 = int_to_ptr.vmem [resolvable:$true] %s29
      %35 = dma.hbm_to_vmem [thread:$0]  %s28, 2048, %s30, [#allocation7], 128, 128, 8
    $region9: #{tpu_custom_call.1} parent=1 // pred_fallthru
      _
    // Predicated region
    $region10: #{tpu_custom_call.1} parent=1 // pred_check
      _
    $region11: #{tpu_custom_call.1} parent=1 // pred_check_branch
      %37 = sbr.rel (0) target = $region13
    $region12: #{tpu_custom_call.1} parent=1 // pred_region
      %39 = dma.done [#allocation4], 256
    $region13: #{tpu_custom_call.1} parent=1 // pred_fallthru
      _
    // Predicated region
    $region14: #{tpu_custom_call.1} parent=1 // pred_check
      _
    $region15: #{tpu_custom_call.1} parent=1 // pred_check_branch
      %41 = sbr.rel (0) target = $region17
    $region16: #{tpu_custom_call.1} parent=1 // pred_region
      %43 = dma.done [#allocation7], 2048
    $region17: #{tpu_custom_call.1} parent=1 // pred_fallthru
      _
    %p44 = scmp.eq.s32.totalorder 0, 0
    // Predicated region
    $region18: #{tpu_custom_call.1} parent=1 // pred_check
      %p45 = pneg %p44
    $region19: #{tpu_custom_call.1} parent=1 // pred_check_branch
      %47 = sbr.rel (%p45) target = $region21
    $region20: #{tpu_custom_call.1} parent=1 // pred_region
      %v48 = vld [vmem:[#allocation3] sm:$0xff]
      %v49 = vld [vmem:[#allocation3 + $0x8] sm:$0xff]
      %50 = vst [vmem:[#allocation2] sm:$0xff] %v48
      %51 = vst [vmem:[#allocation2 + $0x8] sm:$0xff] %v49
    $region21: #{tpu_custom_call.1} parent=1 // pred_fallthru
      _
    %v52 = vld [vmem:[#allocation2] sm:$0xff]
    %v53 = vld [vmem:[#allocation2 + $0x8] sm:$0xff]
    %v54 = vld [vmem:[#allocation6] sm:$0xff]
    %v55 = vld [vmem:[#allocation6 + $0x8] sm:$0xff]
    %v56 = vadd.f32 %v52, %v54
    %v57 = vadd.f32 %v53, %v55
    %vm58 = vcmp.gt.f32.partialorder %v56, 1.0
    %vm59 = vcmp.gt.f32.partialorder %v57, 1.0
    %v60 = vsel %vm58, 1.0, 0.0
    %v61 = vsel %vm59, 1.0, 0.0
    %62 = vst [vmem:[#allocation8] sm:$0xff] %v60
    %63 = vst [vmem:[#allocation8 + $0x8] sm:$0xff] %v61
    %v64 = vsub.f32 %v56, %v60
    %v65 = vsub.f32 %v57, %v61
    %s66 = scalar_lea.vmem [#allocation6], 16
    %v67 = vld [vmem:[%s66] sm:$0xff]
    %v68 = vld [vmem:[%s66 + $0x8] sm:$0xff]
    %v69 = vadd.f32 %v64, %v67
    %v70 = vadd.f32 %v65, %v68
    %vm71 = vcmp.gt.f32.partialorder %v69, 1.0
    %vm72 = vcmp.gt.f32.partialorder %v70, 1.0
    %v73 = vsel %vm71, 1.0, 0.0
    %v74 = vsel %vm72, 1.0, 0.0
    %s75 = scalar_lea.vmem [#allocation8], 16
    %76 = vst [vmem:[%s75] sm:$0xff] %v73
    %77 = vst [vmem:[%s75 + $0x8] sm:$0xff] %v74
    %v78 = vsub.f32 %v69, %v73
    %v79 = vsub.f32 %v70, %v74
    %s80 = scalar_lea.vmem [#allocation6], 32
    %v81 = vld [vmem:[%s80] sm:$0xff]
    %v82 = vld [vmem:[%s80 + $0x8] sm:$0xff]
    %v83 = vadd.f32 %v78, %v81
    %v84 = vadd.f32 %v79, %v82
    %vm85 = vcmp.gt.f32.partialorder %v83, 1.0
    %vm86 = vcmp.gt.f32.partialorder %v84, 1.0
    %v87 = vsel %vm85, 1.0, 0.0
    %v88 = vsel %vm86, 1.0, 0.0
    %s89 = scalar_lea.vmem [#allocation8], 32
    %90 = vst [vmem:[%s89] sm:$0xff] %v87
    %91 = vst [vmem:[%s89 + $0x8] sm:$0xff] %v88
    %v92 = vsub.f32 %v83, %v87
    %v93 = vsub.f32 %v84, %v88
    %s94 = scalar_lea.vmem [#allocation6], 48
    %v95 = vld [vmem:[%s94] sm:$0xff]
    %v96 = vld [vmem:[%s94 + $0x8] sm:$0xff]
    %v97 = vadd.f32 %v92, %v95
    %v98 = vadd.f32 %v93, %v96
    %vm99 = vcmp.gt.f32.partialorder %v97, 1.0
    %vm100 = vcmp.gt.f32.partialorder %v98, 1.0
    %v101 = vsel %vm99, 1.0, 0.0
    %v102 = vsel %vm100, 1.0, 0.0
    %s103 = scalar_lea.vmem [#allocation8], 48
    %104 = vst [vmem:[%s103] sm:$0xff] %v101
    %105 = vst [vmem:[%s103 + $0x8] sm:$0xff] %v102
    %v106 = vsub.f32 %v97, %v101
    %v107 = vsub.f32 %v98, %v102
    %s108 = scalar_lea.vmem [#allocation6], 64
    %v109 = vld [vmem:[%s108] sm:$0xff]
    %v110 = vld [vmem:[%s108 + $0x8] sm:$0xff]
    %v111 = vadd.f32 %v106, %v109
    %v112 = vadd.f32 %v107, %v110
    %vm113 = vcmp.gt.f32.partialorder %v111, 1.0
    %vm114 = vcmp.gt.f32.partialorder %v112, 1.0
    %v115 = vsel %vm113, 1.0, 0.0
    %v116 = vsel %vm114, 1.0, 0.0
    %s117 = scalar_lea.vmem [#allocation8], 64
    %118 = vst [vmem:[%s117] sm:$0xff] %v115
    %119 = vst [vmem:[%s117 + $0x8] sm:$0xff] %v116
    %v120 = vsub.f32 %v111, %v115
    %v121 = vsub.f32 %v112, %v116
    %s122 = scalar_lea.vmem [#allocation6], 80
    %v123 = vld [vmem:[%s122] sm:$0xff]
    %v124 = vld [vmem:[%s122 + $0x8] sm:$0xff]
    %v125 = vadd.f32 %v120, %v123
    %v126 = vadd.f32 %v121, %v124
    %vm127 = vcmp.gt.f32.partialorder %v125, 1.0
    %vm128 = vcmp.gt.f32.partialorder %v126, 1.0
    %v129 = vsel %vm127, 1.0, 0.0
    %v130 = vsel %vm128, 1.0, 0.0
    %s131 = scalar_lea.vmem [#allocation8], 80
    %132 = vst [vmem:[%s131] sm:$0xff] %v129
    %133 = vst [vmem:[%s131 + $0x8] sm:$0xff] %v130
    %v134 = vsub.f32 %v125, %v129
    %v135 = vsub.f32 %v126, %v130
    %s136 = scalar_lea.vmem [#allocation6], 96
    %v137 = vld [vmem:[%s136] sm:$0xff]
    %v138 = vld [vmem:[%s136 + $0x8] sm:$0xff]
    %v139 = vadd.f32 %v134, %v137
    %v140 = vadd.f32 %v135, %v138
    %vm141 = vcmp.gt.f32.partialorder %v139, 1.0
    %vm142 = vcmp.gt.f32.partialorder %v140, 1.0
    %v143 = vsel %vm141, 1.0, 0.0
    %v144 = vsel %vm142, 1.0, 0.0
    %s145 = scalar_lea.vmem [#allocation8], 96
    %146 = vst [vmem:[%s145] sm:$0xff] %v143
    %147 = vst [vmem:[%s145 + $0x8] sm:$0xff] %v144
    %v148 = vsub.f32 %v139, %v143
    %v149 = vsub.f32 %v140, %v144
    %s150 = scalar_lea.vmem [#allocation6], 112
    %v151 = vld [vmem:[%s150] sm:$0xff]
    %v152 = vld [vmem:[%s150 + $0x8] sm:$0xff]
    %v153 = vadd.f32 %v148, %v151
    %v154 = vadd.f32 %v149, %v152
    %vm155 = vcmp.gt.f32.partialorder %v153, 1.0
    %vm156 = vcmp.gt.f32.partialorder %v154, 1.0
    %v157 = vsel %vm155, 1.0, 0.0
    %v158 = vsel %vm156, 1.0, 0.0
    %s159 = scalar_lea.vmem [#allocation8], 112
    %160 = vst [vmem:[%s159] sm:$0xff] %v157
    %161 = vst [vmem:[%s159 + $0x8] sm:$0xff] %v158
    %v162 = vsub.f32 %v153, %v157
    %v163 = vsub.f32 %v154, %v158
    %164 = vst [vmem:[#allocation2] sm:$0xff] %v162
    %165 = vst [vmem:[#allocation2 + $0x8] sm:$0xff] %v163
    // Predicated region
    $region22: #{tpu_custom_call.1} parent=1 // pred_check
      _
    $region23: #{tpu_custom_call.1} parent=1 // pred_check_branch
      %167 = sbr.rel (0) target = $region25
    $region24: #{tpu_custom_call.1} parent=1 // pred_region
      %169 = vsyncadd [#allocation5], 0
      %s170 = sshll.u32 [#allocation8], 4
      %s171 = int_to_ptr.vmem [resolvable:$true] %s170
      %s172 = sshll.u32 %s2, 4
      %s173 = int_to_ptr.hbm [resolvable:$true] %s172
      %178 = dma.vmem_to_hbm [thread:$0]  %s171, 2048, %s173, [#allocation5], 128, 128, 8
    $region25: #{tpu_custom_call.1} parent=1 // pred_fallthru
      _
    // Predicated region
    $region26: #{tpu_custom_call.1} parent=1 // pred_check
      _
    $region27: #{tpu_custom_call.1} parent=1 // pred_check_branch
      %180 = sbr.rel (0) target = $region29
    $region28: #{tpu_custom_call.1} parent=1 // pred_region
      %182 = dma.done [#allocation5], 2048
    $region29: #{tpu_custom_call.1} parent=1 // pred_fallthru
      _
    %183 = vsyncpa [#allocation4], 1
    %184 = vsyncpa [#allocation7], 1
    %185 = vsyncpa [#allocation5], 1

</llo_original>
